<compile_context>
chip_gen: v5e
topology: v5e:2x2
jax: 0.10.0
libtpu: 0.0.40
codegen_flags: <defaults>
</compile_context>

<pallas_src>
import jax
import jax.numpy as jnp
from jax.experimental import pallas as pl
from jax.experimental.pallas import tpu as pltpu


def _round_up(x, m):
    return ((x + m - 1) // m) * m


# ---------------- kernel 1: per-node projection  XW = X @ W_t (padded) ----------------

def _proj_kernel(x_ref, wt_ref, o_ref):
    # x_ref: (tile_k, F_in) f32   wt_ref: (F_in, F_pad) f32   o_ref: (tile_k, F_pad) compute_dtype
    o_ref[...] = jnp.dot(
        x_ref[...], wt_ref[...], preferred_element_type=jnp.float32
    ).astype(o_ref.dtype)


# ---------------- kernel 2: neighbourhood aggregation  OUT = A @ XW + b ---------------

def _make_agg_kernel(xw_resident, tile_k):
    def kernel(a_ref, xw_ref, b_ref, o_ref):
        # a_ref:  (tile_n, tile_k)  adjacency tile (dst rows, src cols), compute_dtype
        # xw_ref: (N_k, F_pad) if resident else (tile_k, F_pad), compute_dtype
        # b_ref:  (1, F_pad) f32 padded bias
        # o_ref:  (tile_n, F_pad) f32 output tile, resident across the k axis
        k = pl.program_id(1)

        @pl.when(k == 0)
        def _():
            o_ref[...] = jnp.zeros_like(o_ref)

        if xw_resident:
            start = pl.multiple_of(k * tile_k, tile_k)
            xw = xw_ref[pl.ds(start, tile_k), :]
        else:
            xw = xw_ref[...]

        # bf16 x bf16 (or f32 x f32 on the exact path) -> f32 accumulation in o_ref.
        o_ref[...] += jnp.dot(a_ref[...], xw, preferred_element_type=jnp.float32)

        @pl.when(k == pl.num_programs(1) - 1)
        def _():
            o_ref[...] += b_ref[...]

    return kernel


def gcn_layer(adj, x, w, b, *, tile_n=512, tile_k=1024,
              compute_dtype=jnp.bfloat16, xw_resident_budget=12 * 2**20):
    """adj: (N, N) with adj[dst, src] in {0,1}; x: (N, F_in); w: (F_out, F_in); b: (F_out,).

    compute_dtype=bf16 is exact for a 0/1 adjacency; pass jnp.float32 for a
    normalized (weighted) adjacency if bit-exact aggregation is required.
    """
    N, f_in = x.shape
    f_out = w.shape[0]
    f_pad = _round_up(f_out, 128)                 # lane-dense output width
    itemsize = jnp.dtype(compute_dtype).itemsize

    # ---- tile selection + N padding (no full-dim fallback) ----
    tile_n = _round_up(max(128, min(tile_n, _round_up(N, 128))), 128)
    tile_k = _round_up(max(128, min(tile_k, _round_up(N, 128))), 128)
    n_rows = _round_up(N, tile_n)                 # padded dst rows
    n_cols = _round_up(N, tile_k)                 # padded src cols

    # ---- wrapper-side layout plumbing (no compute hoisted out of Pallas) ----
    adj_p = jnp.pad(adj, ((0, n_rows - N), (0, n_cols - N))).astype(compute_dtype)
    x_p = jnp.pad(x.astype(jnp.float32), ((0, n_cols - N), (0, 0)))
    wt_pad = jnp.zeros((f_in, f_pad), dtype=jnp.float32).at[:, :f_out].set(w.T)
    b_pad = jnp.zeros((1, f_pad), dtype=jnp.float32).at[:, :f_out].set(b)

    # ---- pass 1: XW = X @ W.T in compute_dtype, padded to 128 lanes ----
    xw_pad = pl.pallas_call(
        _proj_kernel,
        out_shape=jax.ShapeDtypeStruct((n_cols, f_pad), compute_dtype),
        grid_spec=pltpu.PrefetchScalarGridSpec(
            num_scalar_prefetch=0,
            grid=(n_cols // tile_k,),
            in_specs=[
                pl.BlockSpec((tile_k, f_in), lambda i: (i, 0)),
                pl.BlockSpec((f_in, f_pad), lambda i: (0, 0)),
            ],
            out_specs=pl.BlockSpec((tile_k, f_pad), lambda i: (i, 0)),
        ),
        compiler_params=pltpu.CompilerParams(
            dimension_semantics=("parallel",),
        ),
        cost_estimate=pl.CostEstimate(
            flops=2 * n_cols * f_in * f_pad,
            transcendentals=0,
            bytes_accessed=n_cols * f_in * 4 + f_in * f_pad * 4
            + n_cols * f_pad * itemsize,
        ),
    )(x_p, wt_pad)

    # ---- pass 2: OUT = A @ XW + b ----
    grid_i = n_rows // tile_n
    grid_k = n_cols // tile_k

    # Keep XW fully resident in VMEM when it fits a modest budget (one DMA total).
    xw_bytes = n_cols * f_pad * itemsize
    xw_resident = xw_bytes <= xw_resident_budget

    if xw_resident:
        xw_spec = pl.BlockSpec((n_cols, f_pad), lambda i, k: (0, 0))
        xw_buf = xw_bytes
    else:
        xw_spec = pl.BlockSpec((tile_k, f_pad), lambda i, k: (k, 0))
        xw_buf = 2 * tile_k * f_pad * itemsize            # double-buffered

    vmem_needed = (
        2 * tile_n * tile_k * itemsize        # double-buffered adjacency tile
        + xw_buf                              # XW (resident or streamed)
        + 2 * tile_n * f_pad * 4              # double-buffered f32 output tile
        + 2 * 8 * f_pad * 4                   # bias block (sublane-padded)
    )
    # Cap well below v7x's 64 MiB physical VMEM, with headroom for Mosaic scratch.
    vmem_limit = int(min(48 * 2**20, max(vmem_needed + 4 * 2**20, 16 * 2**20)))

    out_pad = pl.pallas_call(
        _make_agg_kernel(xw_resident, tile_k),
        out_shape=jax.ShapeDtypeStruct((n_rows, f_pad), jnp.float32),
        grid_spec=pltpu.PrefetchScalarGridSpec(
            num_scalar_prefetch=0,
            grid=(grid_i, grid_k),
            in_specs=[
                pl.BlockSpec((tile_n, tile_k), lambda i, k: (i, k)),   # adjacency tile
                xw_spec,                                               # projected feats
                pl.BlockSpec((1, f_pad), lambda i, k: (0, 0)),         # bias
            ],
            out_specs=pl.BlockSpec((tile_n, f_pad), lambda i, k: (i, 0)),
        ),
        compiler_params=pltpu.CompilerParams(
            dimension_semantics=("parallel", "arbitrary"),
            vmem_limit_bytes=vmem_limit,
        ),
        cost_estimate=pl.CostEstimate(
            flops=2 * n_rows * n_cols * f_pad,
            transcendentals=0,
            bytes_accessed=(
                n_rows * n_cols * itemsize
                + (1 if xw_resident else grid_i) * n_cols * f_pad * itemsize
                + n_rows * f_pad * 4
            ),
        ),
    )(adj_p, xw_pad, b_pad)

    return out_pad[:N, :f_out]


if __name__ == "__main__":
    key = jax.random.PRNGKey(0)
    k_feat, k_adj, k_w, k_b = jax.random.split(key, 4)

    N = 128          # number of graph nodes
    in_feats = 32
    out_feats = 16

    # Deterministic synthetic inputs / parameters.
    feature = jax.random.normal(k_feat, (N, in_feats), dtype=jnp.float32)
    # Random sparse-ish directed graph as a dense 0/1 adjacency (A[dst, src]).
    adj = (jax.random.uniform(k_adj, (N, N)) < 0.1).astype(jnp.float32)
    # nn.Linear(in_feats, out_feats): weight (out, in), bias (out,)
    bound = 1.0 / (in_feats ** 0.5)
    w = jax.random.uniform(k_w, (out_feats, in_feats),
                           minval=-bound, maxval=bound, dtype=jnp.float32)
    b = jax.random.uniform(k_b, (out_feats,),
                           minval=-bound, maxval=bound, dtype=jnp.float32)

    # Pure-JAX reference for correctness (raw copy_u -> sum, then Linear).
    ref = (adj @ feature) @ w.T + b

    # Exact f32 path (for weighted/normalized adjacencies).
    out_f32 = jax.block_until_ready(
        gcn_layer(adj, feature, w, b, compute_dtype=jnp.float32))
    assert out_f32.shape == (N, out_feats)
    assert jnp.allclose(out_f32, ref, atol=1e-4, rtol=1e-4), "f32 path mismatch"

    # Fast bf16 MXU path (default): 0/1 adjacency exact, XW rounded to bf16.
    out = jax.block_until_ready(gcn_layer(adj, feature, w, b))
    assert out.shape == (N, out_feats)
    assert jnp.allclose(out, ref, atol=3e-2, rtol=2e-2), "bf16 path mismatch"

    print("KERNEL_OK")
</pallas_src>

<mosaic_0001>
module attributes {stable_mosaic.version = 11 : i64} {
  func.func @_proj_kernel(%arg0: i32, %arg1: memref<128x32xf32, #tpu.memory_space<vmem>>, %arg2: memref<32x128xf32, #tpu.memory_space<vmem>>, %arg3: memref<128x128xf32, #tpu.memory_space<vmem>>) attributes {dimension_semantics = [#tpu.dimension_semantics<parallel>], iteration_bounds = array<i64: 1>, scalar_prefetch = 0 : i64, scratch_operands = 0 : i64, tpu.core_type = #tpu.core_type<tc>, window_params = [{transform_indices = @transform_0, window_bounds = array<i64: 128, 32>}, {pipeline_mode = #tpu.pipeline_mode<synchronous>, transform_indices = @transform_1, window_bounds = array<i64: 32, 128>}, {transform_indices = @transform_2, window_bounds = array<i64: 128, 128>}]} {
    %c0 = arith.constant 0 : index
    %c0_0 = arith.constant 0 : index
    %0 = vector.load %arg1[%c0, %c0_0] : memref<128x32xf32, #tpu.memory_space<vmem>>, vector<128x32xf32>
    %c0_1 = arith.constant 0 : index
    %c0_2 = arith.constant 0 : index
    %1 = vector.load %arg2[%c0_1, %c0_2] : memref<32x128xf32, #tpu.memory_space<vmem>>, vector<32x128xf32>
    %cst = arith.constant dense<0.000000e+00> : vector<128x128xf32>
    %2 = tpu.matmul %0, %1, %cst {dimension_numbers = #tpu.dot_dimension_numbers<[1], [0], [0], [1], [0, 0, 1, 1], [], []>} : vector<128x32xf32>, vector<32x128xf32>, vector<128x128xf32> -> vector<128x128xf32>
    %c0_3 = arith.constant 0 : index
    %c0_4 = arith.constant 0 : index
    %3 = vector.load %arg3[%c0_3, %c0_4] : memref<128x128xf32, #tpu.memory_space<vmem>>, vector<128x128xf32>
    tpu.vector_store %arg3[%c0_3, %c0_4], %2 {strides = array<i32>} : memref<128x128xf32, #tpu.memory_space<vmem>>, vector<128x128xf32>,
    return
  }
  func.func @transform_0(%arg0: i32) -> (i32, i32) {
    %c0_i32 = arith.constant 0 : i32
    %c0_i32_0 = arith.constant 0 : i32
    return %arg0, %c0_i32 : i32, i32
  }
  func.func @transform_1(%arg0: i32) -> (i32, i32) {
    %c0_i32 = arith.constant 0 : i32
    %c0_i32_0 = arith.constant 0 : i32
    %c0_i32_1 = arith.constant 0 : i32
    return %c0_i32, %c0_i32_0 : i32, i32
  }
  func.func @transform_2(%arg0: i32) -> (i32, i32) {
    %c0_i32 = arith.constant 0 : i32
    %c0_i32_0 = arith.constant 0 : i32
    return %arg0, %c0_i32 : i32, i32
  }
}

</mosaic_0001>

<llo_original>
// kernel: tpu_custom_call.1
$region0: #{tpu_custom_call.1}
  #allocation0 [shape = 'u32[]', space=smem, size = 0x4, offset = 0x4, fixed_abs, tag = 'smem constant byte address 0x4 - core index']
  #allocation1 [shape = 'u32[72,128]{1,0:T(1,128)}', space=vmem, size = 0x9000, scoped, tag = 'internal scratch']
  %s0 = inlined_call_operand.vmem [shape: f32[128,32], index: 0, kind: input, shape index: {}]
  %s1 = inlined_call_operand.vmem [shape: f32[32,128], index: 1, kind: input, shape index: {}]
  %s2 = inlined_call_operand.hbm [shape: f32[128,128], index: 2, kind: output, shape index: {}]
  %s3 = sld [smem:[#allocation0]]
  $region18: #{tpu_custom_call.1} parent=0
    _
  %s5 = ssub.s32 1, %s3
  %s6 = scalar_select 0, %s5, %s3
  $region1: #{tpu_custom_call.1} parent=0
    #allocation2 [shape = 'u8[65536]{0}', space=vmem, size = 0x10000, scoped, tag = 'output window, operand 0, single buffered']
    #allocation3 [shape = 's32[1]{0}', space=sflag, size = 0x4, scoped, tag = 'scoped memory for tpu_custom_call.1']
    %7 = vsyncpa [#allocation3], 0
    // Predicated region
    $region2: #{tpu_custom_call.1} parent=1 // pred_check
      _
    $region3: #{tpu_custom_call.1} parent=1 // pred_check_branch
      %9 = sbr.rel (0) target = $region5
    $region4: #{tpu_custom_call.1} parent=1 // pred_region
      _
    $region5: #{tpu_custom_call.1} parent=1 // pred_fallthru
      _
    // Predicated region
    $region6: #{tpu_custom_call.1} parent=1 // pred_check
      _
    $region7: #{tpu_custom_call.1} parent=1 // pred_check_branch
      %11 = sbr.rel (0) target = $region9
    $region8: #{tpu_custom_call.1} parent=1 // pred_region
      _
    $region9: #{tpu_custom_call.1} parent=1 // pred_fallthru
      _
    %v12 = vld [vmem:[%s0] sm:$0xff]
    %v13 = vld [vmem:[%s0 + $0x8] sm:$0xff]
    %v14 = vld [vmem:[%s0 + $0x10] sm:$0xff]
    %v15 = vld [vmem:[%s0 + $0x18] sm:$0xff]
    %v16 = vld [vmem:[%s0 + $0x20] sm:$0xff]
    %v17 = vld [vmem:[%s0 + $0x28] sm:$0xff]
    %v18 = vld [vmem:[%s0 + $0x30] sm:$0xff]
    %v19 = vld [vmem:[%s0 + $0x38] sm:$0xff]
    %v20 = vld [vmem:[%s0 + $0x40] sm:$0xff]
    %v21 = vld [vmem:[%s0 + $0x48] sm:$0xff]
    %v22 = vld [vmem:[%s0 + $0x50] sm:$0xff]
    %v23 = vld [vmem:[%s0 + $0x58] sm:$0xff]
    %v24 = vld [vmem:[%s0 + $0x60] sm:$0xff]
    %v25 = vld [vmem:[%s0 + $0x68] sm:$0xff]
    %v26 = vld [vmem:[%s0 + $0x70] sm:$0xff]
    %v27 = vld [vmem:[%s0 + $0x78] sm:$0xff]
    %v28 = vld [vmem:[%s1] sm:$0xff]
    %v29 = vld [vmem:[%s1 + $0x8] sm:$0xff]
    %v30 = vld [vmem:[%s1 + $0x10] sm:$0xff]
    %v31 = vld [vmem:[%s1 + $0x18] sm:$0xff]
    %vm32 = vcmask 261120
    %v34 = vsel %vm32, %v12, 0
    %v37 = vsel %vm32, %v13, 0
    %v40 = vsel %vm32, %v14, 0
    %v43 = vsel %vm32, %v15, 0
    %v46 = vsel %vm32, %v16, 0
    %v49 = vsel %vm32, %v17, 0
    %v52 = vsel %vm32, %v18, 0
    %v55 = vsel %vm32, %v19, 0
    %v58 = vsel %vm32, %v20, 0
    %v61 = vsel %vm32, %v21, 0
    %v64 = vsel %vm32, %v22, 0
    %v67 = vsel %vm32, %v23, 0
    %v70 = vsel %vm32, %v24, 0
    %v73 = vsel %vm32, %v25, 0
    %v76 = vsel %vm32, %v26, 0
    %v79 = vsel %vm32, %v27, 0
    %81 = vmatpush.msra.mxu0 0.0
    %82 = vmatpush.msra.mxu0 0.0
    %83 = vmatpush.msra.mxu0 0.0
    %84 = vmatpush.msra.mxu0 0.0
    %85 = vmatpush.msra.mxu0 0.0
    %86 = vmatpush.msra.mxu0 0.0
    %87 = vmatpush.msra.mxu0 0.0
    %88 = vmatpush.msra.mxu0 0.0
    %89 = vmatpush.msra.mxu0 0.0
    %90 = vmatpush.msra.mxu0 0.0
    %91 = vmatpush.msra.mxu0 0.0
    %92 = vmatpush.msra.mxu0 0.0
    %93 = vmatpush.msra.mxu0 %v31
    %94 = vmatpush.msra.mxu0 %v30
    %95 = vmatpush.msra.mxu0 %v29
    %96 = vmatpush.msra.mxu0 %v28
    %97 = vmatmul.f32.gmra.mxu0 %v34
    %v98 = vpop.f32.mrf.mxu0
    %v99 = vadd.f32 0.0, %v98
    %100 = vmatmul.f32.gmra.mxu0 %v37
    %v101 = vpop.f32.mrf.mxu0
    %v102 = vadd.f32 0.0, %v101
    %103 = vmatmul.f32.gmra.mxu0 %v40
    %v104 = vpop.f32.mrf.mxu0
    %v105 = vadd.f32 0.0, %v104
    %106 = vmatmul.f32.gmra.mxu0 %v43
    %v107 = vpop.f32.mrf.mxu0
    %v108 = vadd.f32 0.0, %v107
    %109 = vmatmul.f32.gmra.mxu0 %v46
    %v110 = vpop.f32.mrf.mxu0
    %v111 = vadd.f32 0.0, %v110
    %112 = vmatmul.f32.gmra.mxu0 %v49
    %v113 = vpop.f32.mrf.mxu0
    %v114 = vadd.f32 0.0, %v113
    %115 = vmatmul.f32.gmra.mxu0 %v52
    %v116 = vpop.f32.mrf.mxu0
    %v117 = vadd.f32 0.0, %v116
    %118 = vmatmul.f32.gmra.mxu0 %v55
    %v119 = vpop.f32.mrf.mxu0
    %v120 = vadd.f32 0.0, %v119
    %121 = vmatmul.f32.gmra.mxu0 %v58
    %v122 = vpop.f32.mrf.mxu0
    %v123 = vadd.f32 0.0, %v122
    %124 = vmatmul.f32.gmra.mxu0 %v61
    %v125 = vpop.f32.mrf.mxu0
    %v126 = vadd.f32 0.0, %v125
    %127 = vmatmul.f32.gmra.mxu0 %v64
    %v128 = vpop.f32.mrf.mxu0
    %v129 = vadd.f32 0.0, %v128
    %130 = vmatmul.f32.gmra.mxu0 %v67
    %v131 = vpop.f32.mrf.mxu0
    %v132 = vadd.f32 0.0, %v131
    %133 = vmatmul.f32.gmra.mxu0 %v70
    %v134 = vpop.f32.mrf.mxu0
    %v135 = vadd.f32 0.0, %v134
    %136 = vmatmul.f32.gmra.mxu0 %v73
    %v137 = vpop.f32.mrf.mxu0
    %v138 = vadd.f32 0.0, %v137
    %139 = vmatmul.f32.gmra.mxu0 %v76
    %v140 = vpop.f32.mrf.mxu0
    %v141 = vadd.f32 0.0, %v140
    %142 = vmatmul.f32.gmra.mxu0 %v79
    %v143 = vpop.f32.mrf.mxu0
    %v144 = vadd.f32 0.0, %v143
    %145 = vdwg.mxu0
    %146 = vst [vmem:[#allocation2] sm:$0xff] %v99
    %147 = vst [vmem:[#allocation2 + $0x8] sm:$0xff] %v102
    %148 = vst [vmem:[#allocation2 + $0x10] sm:$0xff] %v105
    %149 = vst [vmem:[#allocation2 + $0x18] sm:$0xff] %v108
    %150 = vst [vmem:[#allocation2 + $0x20] sm:$0xff] %v111
    %151 = vst [vmem:[#allocation2 + $0x28] sm:$0xff] %v114
    %152 = vst [vmem:[#allocation2 + $0x30] sm:$0xff] %v117
    %153 = vst [vmem:[#allocation2 + $0x38] sm:$0xff] %v120
    %154 = vst [vmem:[#allocation2 + $0x40] sm:$0xff] %v123
    %155 = vst [vmem:[#allocation2 + $0x48] sm:$0xff] %v126
    %156 = vst [vmem:[#allocation2 + $0x50] sm:$0xff] %v129
    %157 = vst [vmem:[#allocation2 + $0x58] sm:$0xff] %v132
    %158 = vst [vmem:[#allocation2 + $0x60] sm:$0xff] %v135
    %159 = vst [vmem:[#allocation2 + $0x68] sm:$0xff] %v138
    %160 = vst [vmem:[#allocation2 + $0x70] sm:$0xff] %v141
    %161 = vst [vmem:[#allocation2 + $0x78] sm:$0xff] %v144
    // Predicated region
    $region10: #{tpu_custom_call.1} parent=1 // pred_check
      _
    $region11: #{tpu_custom_call.1} parent=1 // pred_check_branch
      %163 = sbr.rel (0) target = $region13
    $region12: #{tpu_custom_call.1} parent=1 // pred_region
      %165 = vsyncadd [#allocation3], 0
      %s166 = sshll.u32 [#allocation2], 4
      %s167 = int_to_ptr.vmem [resolvable:$true] %s166
      %s168 = sshll.u32 %s2, 4
      %s169 = int_to_ptr.hbm [resolvable:$true] %s168
      %174 = dma.vmem_to_hbm [thread:$0]  %s167, 2048, %s169, [#allocation3], 128, 128, 8
    $region13: #{tpu_custom_call.1} parent=1 // pred_fallthru
      _
    // Predicated region
    $region14: #{tpu_custom_call.1} parent=1 // pred_check
      _
    $region15: #{tpu_custom_call.1} parent=1 // pred_check_branch
      %176 = sbr.rel (0) target = $region17
    $region16: #{tpu_custom_call.1} parent=1 // pred_region
      %178 = dma.done [#allocation3], 2048
    $region17: #{tpu_custom_call.1} parent=1 // pred_fallthru
      _
    %179 = vsyncpa [#allocation3], 1

</llo_original>
